<compile_context>
chip_gen: v7x
topology: tpu7x:2x2x1
jax: 0.10.0
libtpu: 0.0.40
codegen_flags: <defaults>
</compile_context>

<pallas_src>
import functools

import jax
import jax.numpy as jnp
from jax.experimental import pallas as pl
from jax.experimental.pallas import tpu as pltpu

LANE = 128


def _pad_dim(a, axis, multiple):
    pad = (-a.shape[axis]) % multiple
    if pad == 0:
        return a
    widths = [(0, 0)] * a.ndim
    widths[axis] = (0, pad)
    return jnp.pad(a, widths)


# --------------------------------------------------------------------------
# Pallas kernel: one grid step = one time window's 2-layer GCN encoder.
# --------------------------------------------------------------------------
def _gnn_window_kernel(a_ref, x_ref, w1_ref, b1_ref, w2_ref, b2_ref, o_ref):
    a = a_ref[0]             # (N, N)    bf16
    x = x_ref[0]             # (N, Fp)   bf16
    w1 = w1_ref[0]           # (Fp, Hp)  bf16
    w2 = w2_ref[0]           # (Hp, Op)  bf16

    # Layer 1 (reassociated): relu(A @ (X @ W1) + b1)
    xw1 = jnp.dot(x, w1, preferred_element_type=jnp.float32)          # (N, Hp)
    h1 = jnp.dot(a, xw1.astype(jnp.bfloat16),
                 preferred_element_type=jnp.float32)                  # (N, Hp)
    h1 = jnp.maximum(h1 + b1_ref[0], 0.0)                             # f32

    # Layer 2 (reassociated, no activation): A @ (H1 @ W2) + b2
    h1w2 = jnp.dot(h1.astype(jnp.bfloat16), w2,
                   preferred_element_type=jnp.float32)                # (N, Op)
    h2 = jnp.dot(a, h1w2.astype(jnp.bfloat16),
                 preferred_element_type=jnp.float32)                  # (N, Op)
    o_ref[0] = (h2 + b2_ref[0]).astype(o_ref.dtype)


def gnn_encoder_all_windows(adj, x, w1, b1, w2, b2):
    """Run every window's GCN encoder in a single fused pallas_call.

    adj: (W, N, N) f32, x: (W, N, F_in) f32,
    w1: (W, F_in, H), b1: (W, 1, H), w2: (W, H, F_out), b2: (W, 1, F_out).
    Returns (W, N, F_out) float32.
    """
    window, n, _ = adj.shape
    f_out = w2.shape[-1]

    # Lane-dense zero padding of the feature dims (exact: padded cols are 0).
    xp = _pad_dim(x, -1, LANE).astype(jnp.bfloat16)
    w1p = _pad_dim(_pad_dim(w1, 1, LANE), 2, LANE).astype(jnp.bfloat16)
    b1p = _pad_dim(b1, -1, LANE).astype(jnp.float32)
    w2p = _pad_dim(_pad_dim(w2, 1, LANE), 2, LANE).astype(jnp.bfloat16)
    b2p = _pad_dim(b2, -1, LANE).astype(jnp.float32)
    adj_bf = adj.astype(jnp.bfloat16)

    fp = xp.shape[-1]
    hp = w1p.shape[-1]
    op = w2p.shape[-1]

    spec3 = lambda shape: pl.BlockSpec(shape, lambda t: (t, 0, 0))

    out = pl.pallas_call(
        _gnn_window_kernel,
        out_shape=jax.ShapeDtypeStruct((window, n, op), jnp.float32),
        grid=(window,),
        in_specs=[
            spec3((1, n, n)),     # A
            spec3((1, n, fp)),    # X (dynamic features)
            spec3((1, fp, hp)),   # W1
            spec3((1, 1, hp)),    # b1
            spec3((1, hp, op)),   # W2
            spec3((1, 1, op)),    # b2
        ],
        out_specs=spec3((1, n, op)),
        compiler_params=pltpu.CompilerParams(
            dimension_semantics=("parallel",)),
    )(adj_bf, xp, w1p, b1p, w2p, b2p)

    return out[..., :f_out]


# --------------------------------------------------------------------------
# SingleGNN forward (glue in plain JAX, GNN hot-path in one Pallas kernel).
# --------------------------------------------------------------------------
def single_gnn_forward(params, static_dense_x, static_sparse_x,
                       dynamic_dense_x, dynamic_sparse_x, edges, weights,
                       num_nodes):
    # ---- static features: embedding lookups + concat ----
    static_embs = [tbl[static_sparse_x[:, i]]
                   for i, tbl in enumerate(params["static_embeds"])]
    static_x = jnp.concatenate(static_embs + [static_dense_x], axis=-1)   # (N, S)

    window = dynamic_dense_x.shape[0]

    # ---- dynamic features, vectorized over the whole window axis ----
    dyn_embs = [tbl[dynamic_sparse_x[:, :, i]]
                for i, tbl in enumerate(params["dynamic_embeds"])]        # (W, N, E)
    static_rep = jnp.broadcast_to(static_x[None], (window,) + static_x.shape)
    dyn_x = jnp.concatenate(dyn_embs + [dynamic_dense_x, static_rep], axis=-1)

    # ---- dense weighted adjacency A[t, dst, src] += w, one scatter ----
    src = edges[:, 0]                                                     # (W, E)
    dst = edges[:, 1]                                                     # (W, E)
    t_idx = jnp.broadcast_to(jnp.arange(window)[:, None], src.shape)
    adj = jnp.zeros((window, num_nodes, num_nodes), jnp.float32)
    adj = adj.at[t_idx, dst, src].add(weights)

    # ---- stacked per-window encoder parameters ----
    w1 = jnp.stack([e["w1"] for e in params["graph_encoders"]])           # (W, F_in, H)
    b1 = jnp.stack([e["b1"] for e in params["graph_encoders"]])           # (W, 1, H)
    w2 = jnp.stack([e["w2"] for e in params["graph_encoders"]])           # (W, H, F_out)
    b2 = jnp.stack([e["b2"] for e in params["graph_encoders"]])           # (W, 1, F_out)

    graph_embeds = gnn_encoder_all_windows(adj, dyn_x, w1, b1, w2, b2)    # (W, N, F_out)
    # Reference module returns graph_embeds[0]; all windows are still computed
    # inside the single fused pallas_call (nothing gets DCE'd).
    return graph_embeds[0]


# --------------------------------------------------------------------------
# Deterministic parameter construction (mirrors SingleGNN.__init__ shapes).
# --------------------------------------------------------------------------
def make_params(key, *, entity_dim, static_sparse_dims, dynamic_sparse_dims,
                static_dim, gnn_layers, window_size):
    keys = jax.random.split(key, 16)
    ki = iter(keys)

    static_embeds = [
        0.1 * jax.random.normal(next(ki), (d, entity_dim), jnp.float32)
        for d in static_sparse_dims
    ]
    dynamic_embeds = [
        0.1 * jax.random.normal(next(ki), (d, entity_dim), jnp.float32)
        for d in dynamic_sparse_dims
    ]

    # gnn_params['layers'][0] += static_dim  (as in the PyTorch __init__)
    layers = list(gnn_layers)
    layers[0] += static_dim

    graph_encoders = []
    for _ in range(window_size):
        k1, k2 = jax.random.split(next(ki))
        enc = {
            "w1": 0.1 * jax.random.normal(k1, (layers[0], layers[1]), jnp.float32),
            "b1": jnp.zeros((1, layers[1]), jnp.float32),
            "w2": 0.1 * jax.random.normal(k2, (layers[1], layers[2]), jnp.float32),
            "b2": jnp.zeros((1, layers[2]), jnp.float32),
        }
        graph_encoders.append(enc)

    return {
        "static_embeds": static_embeds,
        "dynamic_embeds": dynamic_embeds,
        "graph_encoders": graph_encoders,
    }


if __name__ == "__main__":
    # Small, deterministic configuration.
    entity_dim = 8
    static_sparse_dims = [5, 7]        # 2 static categorical features
    static_dense_dims = 4
    dynamic_sparse_dims = [6, 9]       # 2 dynamic categorical features
    dynamic_dense_dims = 4
    window_size = 3
    gnn_layers = [len(dynamic_sparse_dims) * entity_dim + dynamic_dense_dims,
                  32, 16]              # [dyn_feat_dim, hidden, out]
    static_dim = len(static_sparse_dims) * entity_dim + static_dense_dims  # 20

    num_nodes = 16
    num_edges = 32

    key = jax.random.PRNGKey(0)
    kp, k1, k2, k3, k4, k5, k6 = jax.random.split(key, 7)

    params = make_params(
        kp,
        entity_dim=entity_dim,
        static_sparse_dims=static_sparse_dims,
        dynamic_sparse_dims=dynamic_sparse_dims,
        static_dim=static_dim,
        gnn_layers=gnn_layers,
        window_size=window_size,
    )

    static_dense_x = jax.random.normal(
        k1, (num_nodes, static_dense_dims), jnp.float32)
    static_sparse_x = jnp.stack(
        [jax.random.randint(jax.random.fold_in(k2, i), (num_nodes,), 0, d)
         for i, d in enumerate(static_sparse_dims)], axis=1).astype(jnp.int32)
    dynamic_dense_x = jax.random.normal(
        k3, (window_size, num_nodes, dynamic_dense_dims), jnp.float32)
    dynamic_sparse_x = jnp.stack(
        [jnp.stack(
            [jax.random.randint(jax.random.fold_in(k4, 10 * t + i),
                                (num_nodes,), 0, d)
             for i, d in enumerate(dynamic_sparse_dims)], axis=1)
         for t in range(window_size)], axis=0).astype(jnp.int32)
    edges = jax.random.randint(
        k5, (window_size, 2, num_edges), 0, num_nodes).astype(jnp.int32)
    weights = jax.random.uniform(
        k6, (window_size, num_edges), jnp.float32)

    fwd = jax.jit(functools.partial(single_gnn_forward, num_nodes=num_nodes))
    out = fwd(params, static_dense_x, static_sparse_x,
              dynamic_dense_x, dynamic_sparse_x, edges, weights)
    jax.block_until_ready(out)
    assert out.shape == (num_nodes, gnn_layers[2]), out.shape
    assert jnp.all(jnp.isfinite(out))
    print("KERNEL_OK")
</pallas_src>

<mosaic_0001>
module attributes {stable_mosaic.version = 11 : i64} {
  func.func private @main(%arg0: i32) attributes {dimension_semantics = [#tpu.dimension_semantics<core_parallel>], iteration_bounds = array<i64: 2>, tpu.core_type = #tpu.core_type<sc_scalar_subcore>, window_params = []} {
    return
  }
}

module attributes {stable_mosaic.version = 11 : i64} {
  func.func private @main(%arg0: i32) attributes {dimension_semantics = [#tpu.dimension_semantics<core_parallel>], iteration_bounds = array<i64: 2>, tpu.core_type = #tpu.core_type<sc_scalar_subcore>, window_params = []} {
    return
  }
}

module attributes {stable_mosaic.version = 11 : i64} {
  func.func @_gnn_window_kernel(%arg0: i32, %arg1: memref<1x16x16xbf16, #tpu.memory_space<vmem>>, %arg2: memref<1x16x128xbf16, #tpu.memory_space<vmem>>, %arg3: memref<1x128x128xbf16, #tpu.memory_space<vmem>>, %arg4: memref<1x1x128xf32, #tpu.memory_space<vmem>>, %arg5: memref<1x128x128xbf16, #tpu.memory_space<vmem>>, %arg6: memref<1x1x128xf32, #tpu.memory_space<vmem>>, %arg7: memref<1x16x128xf32, #tpu.memory_space<vmem>>) attributes {dimension_semantics = [#tpu.dimension_semantics<parallel>], iteration_bounds = array<i64: 3>, scalar_prefetch = 0 : i64, scratch_operands = 0 : i64, tpu.core_type = #tpu.core_type<tc>, window_params = [{transform_indices = @transform_0, window_bounds = array<i64: 1, 16, 16>}, {transform_indices = @transform_1, window_bounds = array<i64: 1, 16, 128>}, {transform_indices = @transform_2, window_bounds = array<i64: 1, 128, 128>}, {transform_indices = @transform_3, window_bounds = array<i64: 1, 1, 128>}, {transform_indices = @transform_4, window_bounds = array<i64: 1, 128, 128>}, {transform_indices = @transform_5, window_bounds = array<i64: 1, 1, 128>}, {transform_indices = @transform_6, window_bounds = array<i64: 1, 16, 128>}]} {
    %c0 = arith.constant 0 : index
    %c0_0 = arith.constant 0 : index
    %c0_1 = arith.constant 0 : index
    %0 = vector.load %arg1[%c0, %c0_0, %c0_1] : memref<1x16x16xbf16, #tpu.memory_space<vmem>>, vector<1x16x16xbf16>
    %1 = vector.shape_cast %0 : vector<1x16x16xbf16> to vector<16x16xbf16>
    %c0_2 = arith.constant 0 : index
    %c0_3 = arith.constant 0 : index
    %c0_4 = arith.constant 0 : index
    %2 = vector.load %arg2[%c0_2, %c0_3, %c0_4] : memref<1x16x128xbf16, #tpu.memory_space<vmem>>, vector<1x16x128xbf16>
    %3 = vector.shape_cast %2 : vector<1x16x128xbf16> to vector<16x128xbf16>
    %c0_5 = arith.constant 0 : index
    %c0_6 = arith.constant 0 : index
    %c0_7 = arith.constant 0 : index
    %4 = vector.load %arg3[%c0_5, %c0_6, %c0_7] : memref<1x128x128xbf16, #tpu.memory_space<vmem>>, vector<1x128x128xbf16>
    %5 = vector.shape_cast %4 : vector<1x128x128xbf16> to vector<128x128xbf16>
    %c0_8 = arith.constant 0 : index
    %c0_9 = arith.constant 0 : index
    %c0_10 = arith.constant 0 : index
    %6 = vector.load %arg5[%c0_8, %c0_9, %c0_10] : memref<1x128x128xbf16, #tpu.memory_space<vmem>>, vector<1x128x128xbf16>
    %7 = vector.shape_cast %6 : vector<1x128x128xbf16> to vector<128x128xbf16>
    %cst = arith.constant dense<0.000000e+00> : vector<16x128xf32>
    %8 = tpu.matmul %3, %5, %cst {dimension_numbers = #tpu.dot_dimension_numbers<[1], [0], [0], [1], [0, 0, 1, 1], [], []>} : vector<16x128xbf16>, vector<128x128xbf16>, vector<16x128xf32> -> vector<16x128xf32>
    %9 = arith.truncf %8 : vector<16x128xf32> to vector<16x128xbf16>
    %cst_11 = arith.constant dense<0.000000e+00> : vector<16x128xf32>
    %10 = tpu.matmul %1, %9, %cst_11 {dimension_numbers = #tpu.dot_dimension_numbers<[1], [0], [0], [1], [0, 0, 1, 1], [], []>} : vector<16x16xbf16>, vector<16x128xbf16>, vector<16x128xf32> -> vector<16x128xf32>
    %c0_12 = arith.constant 0 : index
    %c0_13 = arith.constant 0 : index
    %c0_14 = arith.constant 0 : index
    %11 = vector.load %arg4[%c0_12, %c0_13, %c0_14] : memref<1x1x128xf32, #tpu.memory_space<vmem>>, vector<1x1x128xf32>
    %12 = vector.shape_cast %11 : vector<1x1x128xf32> to vector<1x128xf32>
    %13 = vector.broadcast %12 : vector<1x128xf32> to vector<16x128xf32>
    %14 = arith.addf %10, %13 : vector<16x128xf32>
    %cst_15 = arith.constant 0.000000e+00 : f32
    %15 = vector.broadcast %cst_15 : f32 to vector<16x128xf32>
    %16 = arith.maximumf %14, %15 : vector<16x128xf32>
    %17 = arith.truncf %16 : vector<16x128xf32> to vector<16x128xbf16>
    %cst_16 = arith.constant dense<0.000000e+00> : vector<16x128xf32>
    %18 = tpu.matmul %17, %7, %cst_16 {dimension_numbers = #tpu.dot_dimension_numbers<[1], [0], [0], [1], [0, 0, 1, 1], [], []>} : vector<16x128xbf16>, vector<128x128xbf16>, vector<16x128xf32> -> vector<16x128xf32>
    %19 = arith.truncf %18 : vector<16x128xf32> to vector<16x128xbf16>
    %cst_17 = arith.constant dense<0.000000e+00> : vector<16x128xf32>
    %20 = tpu.matmul %1, %19, %cst_17 {dimension_numbers = #tpu.dot_dimension_numbers<[1], [0], [0], [1], [0, 0, 1, 1], [], []>} : vector<16x16xbf16>, vector<16x128xbf16>, vector<16x128xf32> -> vector<16x128xf32>
    %c0_18 = arith.constant 0 : index
    %c0_19 = arith.constant 0 : index
    %c0_20 = arith.constant 0 : index
    %21 = vector.load %arg6[%c0_18, %c0_19, %c0_20] : memref<1x1x128xf32, #tpu.memory_space<vmem>>, vector<1x1x128xf32>
    %22 = vector.shape_cast %21 : vector<1x1x128xf32> to vector<1x128xf32>
    %23 = vector.broadcast %22 : vector<1x128xf32> to vector<16x128xf32>
    %24 = arith.addf %20, %23 : vector<16x128xf32>
    %c0_21 = arith.constant 0 : index
    %c0_22 = arith.constant 0 : index
    %c0_23 = arith.constant 0 : index
    %25 = vector.load %arg7[%c0_21, %c0_22, %c0_23] : memref<1x16x128xf32, #tpu.memory_space<vmem>>, vector<1x16x128xf32>
    %26 = vector.shape_cast %25 : vector<1x16x128xf32> to vector<16x128xf32>
    %27 = vector.shape_cast %24 : vector<16x128xf32> to vector<1x16x128xf32>
    tpu.vector_store %arg7[%c0_21, %c0_22, %c0_23], %27 {strides = array<i32>} : memref<1x16x128xf32, #tpu.memory_space<vmem>>, vector<1x16x128xf32>,
    return
  }
  func.func @transform_0(%arg0: i32) -> (i32, i32, i32) {
    %c0_i32 = arith.constant 0 : i32
    %c0_i32_0 = arith.constant 0 : i32
    %c0_i32_1 = arith.constant 0 : i32
    return %arg0, %c0_i32, %c0_i32_0 : i32, i32, i32
  }
  func.func @transform_1(%arg0: i32) -> (i32, i32, i32) {
    %c0_i32 = arith.constant 0 : i32
    %c0_i32_0 = arith.constant 0 : i32
    %c0_i32_1 = arith.constant 0 : i32
    return %arg0, %c0_i32, %c0_i32_0 : i32, i32, i32
  }
  func.func @transform_2(%arg0: i32) -> (i32, i32, i32) {
    %c0_i32 = arith.constant 0 : i32
    %c0_i32_0 = arith.constant 0 : i32
    %c0_i32_1 = arith.constant 0 : i32
    return %arg0, %c0_i32, %c0_i32_0 : i32, i32, i32
  }
  func.func @transform_3(%arg0: i32) -> (i32, i32, i32) {
    %c0_i32 = arith.constant 0 : i32
    %c0_i32_0 = arith.constant 0 : i32
    %c0_i32_1 = arith.constant 0 : i32
    return %arg0, %c0_i32, %c0_i32_0 : i32, i32, i32
  }
  func.func @transform_4(%arg0: i32) -> (i32, i32, i32) {
    %c0_i32 = arith.constant 0 : i32
    %c0_i32_0 = arith.constant 0 : i32
    %c0_i32_1 = arith.constant 0 : i32
    return %arg0, %c0_i32, %c0_i32_0 : i32, i32, i32
  }
  func.func @transform_5(%arg0: i32) -> (i32, i32, i32) {
    %c0_i32 = arith.constant 0 : i32
    %c0_i32_0 = arith.constant 0 : i32
    %c0_i32_1 = arith.constant 0 : i32
    return %arg0, %c0_i32, %c0_i32_0 : i32, i32, i32
  }
  func.func @transform_6(%arg0: i32) -> (i32, i32, i32) {
    %c0_i32 = arith.constant 0 : i32
    %c0_i32_0 = arith.constant 0 : i32
    %c0_i32_1 = arith.constant 0 : i32
    return %arg0, %c0_i32, %c0_i32_0 : i32, i32, i32
  }
}

</mosaic_0001>

<llo_original>
// kernel: single_gnn_forward.1
$region0: #{single_gnn_forward.1}
  #allocation0 [shape = 'u32[]', space=smem, size = 0x4, offset = 0x4, fixed_abs, tag = 'smem constant byte address 0x4 - core index']
  #allocation1 [shape = 'u32[144,128]{1,0:T(1,128)}', space=vmem, size = 0x12000, scoped, tag = 'internal scratch']
  %s0 = inlined_call_operand.vmem [shape: bf16[3,16,16], index: 0, kind: input, shape index: {}]
  %s1 = inlined_call_operand.vmem [shape: bf16[3,16,128], index: 1, kind: input, shape index: {}]
  %s2 = inlined_call_operand.vmem [shape: bf16[3,128,128], index: 2, kind: input, shape index: {}]
  %s3 = inlined_call_operand.vmem [shape: f32[3,1,128], index: 3, kind: input, shape index: {}]
  %s4 = inlined_call_operand.vmem [shape: bf16[3,128,128], index: 4, kind: input, shape index: {}]
  %s5 = inlined_call_operand.vmem [shape: f32[3,1,128], index: 5, kind: input, shape index: {}]
  %s6 = inlined_call_operand.vmem [shape: f32[3,16,128], index: 6, kind: output, shape index: {}]
  %s7 = sld [smem:[#allocation0]]
  $region57: #{single_gnn_forward.1} parent=0
    _
  %s9 = ssub.s32 1, %s7
  %s10 = scalar_select 0, %s9, %s7
  loop: start=0, step=1, limit=5
  $region2: #{single_gnn_forward.1} parent=0 // loop_pre_header
    _
  $region3: #{single_gnn_forward.1} parent=0 // loop_header
    %s12 = sphi 0, %s16
    %p13 = scmp.ge.s32.totalorder %s12, 5
    %s22 = sphi 0, %s24
    %s25 = sphi 0, %s22
    %s26 = sphi 0, %s25
    %s42 = sphi 0, %s26
    %s48 = sphi 0, %s50
    %s51 = sphi 0, %s48
    %s52 = sphi 0, %s51
    %s68 = sphi 0, %s52
    %s74 = sphi 0, %s76
    %s77 = sphi 0, %s74
    %s78 = sphi 0, %s77
    %s94 = sphi 0, %s78
    %s100 = sphi 0, %s102
    %s103 = sphi 0, %s100
    %s104 = sphi 0, %s103
    %s120 = sphi 0, %s104
    %s126 = sphi 0, %s128
    %s129 = sphi 0, %s126
    %s130 = sphi 0, %s129
    %s146 = sphi 0, %s130
    %s152 = sphi 0, %s154
    %s155 = sphi 0, %s152
    %s156 = sphi 0, %s155
    %s172 = sphi 0, %s156
    %s178 = sphi 0, %s180
    %s181 = sphi 0, %s178
    %s182 = sphi 0, %s181
    %s198 = sphi 0, %s182
  $region4: #{single_gnn_forward.1} parent=0 // loop_header_branch
    %15 = sbr.rel (%p13) target = $region8
  $region5: #{single_gnn_forward.1} parent=0 // loop_body
    %s17 = ssub.s32 %s12, 1
    %s18 = ssub.s32 %s12, 2
    %s19 = sadd.s32 %s12, 1
    %s20 = ssub.s32 %s12, %s19
    %p21 = scmp.eq.s32.totalorder %s20, 0
    %s23 = sadd.s32 %s22, 1
    %s24 = scalar_select %p21, %s22, %s23
    %p27 = pneg %p21
    %p28 = scmp.eq.s32.totalorder %s12, 2
    %p29 = por %p27, %p28
    %p30 = scmp.ne.s32.totalorder %s22, %s25
    %p31 = scmp.eq.s32.totalorder %s12, 0
    %p32 = por %p30, %p31
    %p33 = scmp.ne.s32.totalorder %s22, %s25
    %p34 = scmp.eq.s32.totalorder %s17, 2
    %p35 = por %p33, %p34
    %p36 = scmp.ne.s32.totalorder %s25, %s26
    %p37 = scmp.eq.s32.totalorder %s17, 0
    %p38 = por %p36, %p37
    %p39 = scmp.ne.s32.totalorder %s25, %s26
    %p40 = scmp.eq.s32.totalorder %s18, 2
    %p41 = por %p39, %p40
    %p43 = scmp.ne.s32.totalorder %s26, %s42
    %p44 = scmp.eq.s32.totalorder %s18, 0
    %p45 = por %p43, %p44
    %s46 = ssub.s32 %s12, %s19
    %p47 = scmp.eq.s32.totalorder %s46, 0
    %s49 = sadd.s32 %s48, 1
    %s50 = scalar_select %p47, %s48, %s49
    %p53 = pneg %p47
    %p54 = scmp.eq.s32.totalorder %s12, 2
    %p55 = por %p53, %p54
    %p56 = scmp.ne.s32.totalorder %s48, %s51
    %p57 = scmp.eq.s32.totalorder %s12, 0
    %p58 = por %p56, %p57
    %p59 = scmp.ne.s32.totalorder %s48, %s51
    %p60 = scmp.eq.s32.totalorder %s17, 2
    %p61 = por %p59, %p60
    %p62 = scmp.ne.s32.totalorder %s51, %s52
    %p63 = scmp.eq.s32.totalorder %s17, 0
    %p64 = por %p62, %p63
    %p65 = scmp.ne.s32.totalorder %s51, %s52
    %p66 = scmp.eq.s32.totalorder %s18, 2
    %p67 = por %p65, %p66
    %p69 = scmp.ne.s32.totalorder %s52, %s68
    %p70 = scmp.eq.s32.totalorder %s18, 0
    %p71 = por %p69, %p70
    %s72 = ssub.s32 %s12, %s19
    %p73 = scmp.eq.s32.totalorder %s72, 0
    %s75 = sadd.s32 %s74, 1
    %s76 = scalar_select %p73, %s74, %s75
    %p79 = pneg %p73
    %p80 = scmp.eq.s32.totalorder %s12, 2
    %p81 = por %p79, %p80
    %p82 = scmp.ne.s32.totalorder %s74, %s77
    %p83 = scmp.eq.s32.totalorder %s12, 0
    %p84 = por %p82, %p83
    %p85 = scmp.ne.s32.totalorder %s74, %s77
    %p86 = scmp.eq.s32.totalorder %s17, 2
    %p87 = por %p85, %p86
    %p88 = scmp.ne.s32.totalorder %s77, %s78
    %p89 = scmp.eq.s32.totalorder %s17, 0
    %p90 = por %p88, %p89
    %p91 = scmp.ne.s32.totalorder %s77, %s78
    %p92 = scmp.eq.s32.totalorder %s18, 2
    %p93 = por %p91, %p92
    %p95 = scmp.ne.s32.totalorder %s78, %s94
    %p96 = scmp.eq.s32.totalorder %s18, 0
    %p97 = por %p95, %p96
    %s98 = ssub.s32 %s12, %s19
    %p99 = scmp.eq.s32.totalorder %s98, 0
    %s101 = sadd.s32 %s100, 1
    %s102 = scalar_select %p99, %s100, %s101
    %p105 = pneg %p99
    %p106 = scmp.eq.s32.totalorder %s12, 2
    %p107 = por %p105, %p106
    %p108 = scmp.ne.s32.totalorder %s100, %s103
    %p109 = scmp.eq.s32.totalorder %s12, 0
    %p110 = por %p108, %p109
    %p111 = scmp.ne.s32.totalorder %s100, %s103
    %p112 = scmp.eq.s32.totalorder %s17, 2
    %p113 = por %p111, %p112
    %p114 = scmp.ne.s32.totalorder %s103, %s104
    %p115 = scmp.eq.s32.totalorder %s17, 0
    %p116 = por %p114, %p115
    %p117 = scmp.ne.s32.totalorder %s103, %s104
    %p118 = scmp.eq.s32.totalorder %s18, 2
    %p119 = por %p117, %p118
    %p121 = scmp.ne.s32.totalorder %s104, %s120
    %p122 = scmp.eq.s32.totalorder %s18, 0
    %p123 = por %p121, %p122
    %s124 = ssub.s32 %s12, %s19
    %p125 = scmp.eq.s32.totalorder %s124, 0
    %s127 = sadd.s32 %s126, 1
    %s128 = scalar_select %p125, %s126, %s127
    %p131 = pneg %p125
    %p132 = scmp.eq.s32.totalorder %s12, 2
    %p133 = por %p131, %p132
    %p134 = scmp.ne.s32.totalorder %s126, %s129
    %p135 = scmp.eq.s32.totalorder %s12, 0
    %p136 = por %p134, %p135
    %p137 = scmp.ne.s32.totalorder %s126, %s129
    %p138 = scmp.eq.s32.totalorder %s17, 2
    %p139 = por %p137, %p138
    %p140 = scmp.ne.s32.totalorder %s129, %s130
    %p141 = scmp.eq.s32.totalorder %s17, 0
    %p142 = por %p140, %p141
    %p143 = scmp.ne.s32.totalorder %s129, %s130
    %p144 = scmp.eq.s32.totalorder %s18, 2
    %p145 = por %p143, %p144
    %p147 = scmp.ne.s32.totalorder %s130, %s146
    %p148 = scmp.eq.s32.totalorder %s18, 0
    %p149 = por %p147, %p148
    %s150 = ssub.s32 %s12, %s19
    %p151 = scmp.eq.s32.totalorder %s150, 0
    %s153 = sadd.s32 %s152, 1
    %s154 = scalar_select %p151, %s152, %s153
    %p157 = pneg %p151
    %p158 = scmp.eq.s32.totalorder %s12, 2
    %p159 = por %p157, %p158
    %p160 = scmp.ne.s32.totalorder %s152, %s155
    %p161 = scmp.eq.s32.totalorder %s12, 0
    %p162 = por %p160, %p161
    %p163 = scmp.ne.s32.totalorder %s152, %s155
    %p164 = scmp.eq.s32.totalorder %s17, 2
    %p165 = por %p163, %p164
    %p166 = scmp.ne.s32.totalorder %s155, %s156
    %p167 = scmp.eq.s32.totalorder %s17, 0
    %p168 = por %p166, %p167
    %p169 = scmp.ne.s32.totalorder %s155, %s156
    %p170 = scmp.eq.s32.totalorder %s18, 2
    %p171 = por %p169, %p170
    %p173 = scmp.ne.s32.totalorder %s156, %s172
    %p174 = scmp.eq.s32.totalorder %s18, 0
    %p175 = por %p173, %p174
    %s176 = ssub.s32 %s12, %s19
    %p177 = scmp.eq.s32.totalorder %s176, 0
    %s179 = sadd.s32 %s178, 1
    %s180 = scalar_select %p177, %s178, %s179
    %p183 = pneg %p177
    %p184 = scmp.eq.s32.totalorder %s12, 2
    %p185 = por %p183, %p184
    %p186 = scmp.ne.s32.totalorder %s178, %s181
    %p187 = scmp.eq.s32.totalorder %s12, 0
    %p188 = por %p186, %p187
    %p189 = scmp.ne.s32.totalorder %s178, %s181
    %p190 = scmp.eq.s32.totalorder %s17, 2
    %p191 = por %p189, %p190
    %p192 = scmp.ne.s32.totalorder %s181, %s182
    %p193 = scmp.eq.s32.totalorder %s17, 0
    %p194 = por %p192, %p193
    %p195 = scmp.ne.s32.totalorder %s181, %s182
    %p196 = scmp.eq.s32.totalorder %s18, 2
    %p197 = por %p195, %p196
    %p199 = scmp.ne.s32.totalorder %s182, %s198
    %p200 = scmp.eq.s32.totalorder %s18, 0
    %p201 = por %p199, %p200
    %p202 = scmp.le.s32.totalorder 1, %s12
    %p203 = scmp.lt.s32.totalorder %s12, 4
    %p204 = pnand %p202, %p203
    %p205 = pneg %p204
    // Predicated region
    $region9: #{single_gnn_forward.1} parent=5 // pred_check
      _
    $region10: #{single_gnn_forward.1} parent=5 // pred_check_branch
      %207 = sbr.rel (%p204) target = $region12
    $region11: #{single_gnn_forward.1} parent=5 // pred_region
      %s208 = ssub.s32 %s12, 1
    $region12: #{single_gnn_forward.1} parent=5 // pred_fallthru
      _
    %p209 = scmp.lt.s32.totalorder %s12, 3
    // Predicated region
    $region13: #{single_gnn_forward.1} parent=5 // pred_check
      %p210 = pneg %p209
    $region14: #{single_gnn_forward.1} parent=5 // pred_check_branch
      %212 = sbr.rel (%p210) target = $region16
    $region15: #{single_gnn_forward.1} parent=5 // pred_region
      // Predicated region
      $region17: #{single_gnn_forward.1} parent=15 // pred_check
        %p213 = pneg %p32
      $region18: #{single_gnn_forward.1} parent=15 // pred_check_branch
        %215 = sbr.rel (%p213) target = $region20
      $region19: #{single_gnn_forward.1} parent=15 // pred_region
        %p216 = scmp.lt.s32.totalorder %s12, 2
        %s217 = scalar_select %p216, %s12, 2
        %s218 = smul.addr %s217, 2
        %s219 = smul.addr %s218, 4
        %s220 = scalar_lea.vmem %s0, %s219
      $region20: #{single_gnn_forward.1} parent=15 // pred_fallthru
        _
      // Predicated region
      $region21: #{single_gnn_forward.1} parent=15 // pred_check
        %p221 = pneg %p58
      $region22: #{single_gnn_forward.1} parent=15 // pred_check_branch
        %223 = sbr.rel (%p221) target = $region24
      $region23: #{single_gnn_forward.1} parent=15 // pred_region
        %p224 = scmp.lt.s32.totalorder %s12, 2
        %s225 = scalar_select %p224, %s12, 2
        %s226 = smul.addr %s225, 2
        %s227 = smul.addr %s226, 4
        %s228 = scalar_lea.vmem %s1, %s227
      $region24: #{single_gnn_forward.1} parent=15 // pred_fallthru
        _
      // Predicated region
      $region25: #{single_gnn_forward.1} parent=15 // pred_check
        %p229 = pneg %p84
      $region26: #{single_gnn_forward.1} parent=15 // pred_check_branch
        %231 = sbr.rel (%p229) target = $region28
      $region27: #{single_gnn_forward.1} parent=15 // pred_region
        %p232 = scmp.lt.s32.totalorder %s12, 2
        %s233 = scalar_select %p232, %s12, 2
        %s234 = smul.addr %s233, 16
        %s235 = smul.addr %s234, 4
        %s236 = scalar_lea.vmem %s2, %s235
      $region28: #{single_gnn_forward.1} parent=15 // pred_fallthru
        _
      // Predicated region
      $region29: #{single_gnn_forward.1} parent=15 // pred_check
        %p237 = pneg %p110
      $region30: #{single_gnn_forward.1} parent=15 // pred_check_branch
        %239 = sbr.rel (%p237) target = $region32
      $region31: #{single_gnn_forward.1} parent=15 // pred_region
        %p240 = scmp.lt.s32.totalorder %s12, 2
        %s241 = scalar_select %p240, %s12, 2
        %s242 = scalar_lea.vmem %s3, %s241
      $region32: #{single_gnn_forward.1} parent=15 // pred_fallthru
        _
      // Predicated region
      $region33: #{single_gnn_forward.1} parent=15 // pred_check
        %p243 = pneg %p136
      $region34: #{single_gnn_forward.1} parent=15 // pred_check_branch
        %245 = sbr.rel (%p243) target = $region36
      $region35: #{single_gnn_forward.1} parent=15 // pred_region
        %p246 = scmp.lt.s32.totalorder %s12, 2
        %s247 = scalar_select %p246, %s12, 2
        %s248 = smul.addr %s247, 16
        %s249 = smul.addr %s248, 4
        %s250 = scalar_lea.vmem %s4, %s249
      $region36: #{single_gnn_forward.1} parent=15 // pred_fallthru
        _
      // Predicated region
      $region37: #{single_gnn_forward.1} parent=15 // pred_check
        %p251 = pneg %p162
      $region38: #{single_gnn_forward.1} parent=15 // pred_check_branch
        %253 = sbr.rel (%p251) target = $region40
      $region39: #{single_gnn_forward.1} parent=15 // pred_region
        %p254 = scmp.lt.s32.totalorder %s12, 2
        %s255 = scalar_select %p254, %s12, 2
        %s256 = scalar_lea.vmem %s5, %s255
      $region40: #{single_gnn_forward.1} parent=15 // pred_fallthru
        _
    $region16: #{single_gnn_forward.1} parent=5 // pred_fallthru
      _
    %p257 = scmp.le.s32.totalorder 1, %s12
    %p258 = scmp.lt.s32.totalorder %s12, 4
    %p259 = pnand %p257, %p258
    %p260 = pneg %p259
    // Predicated region
    $region41: #{single_gnn_forward.1} parent=5 // pred_check
      _
    $region42: #{single_gnn_forward.1} parent=5 // pred_check_branch
      %262 = sbr.rel (%p259) target = $region44
    $region43: #{single_gnn_forward.1} parent=5 // pred_region
      %s263 = ssub.s32 %s12, 1
      %p264 = scmp.lt.s32.totalorder %s17, 2
      %s265 = scalar_select %p264, %s17, 2
      %s266 = smul.addr %s265, 2
      %s267 = smul.addr %s266, 4
      %s268 = scalar_lea.vmem %s0, %s267
      %p269 = pneg %p38
      %p270 = pneg %p35
      %p271 = scmp.lt.s32.totalorder %s17, 2
      %s272 = scalar_select %p271, %s17, 2
      %s273 = smul.addr %s272, 2
      %s274 = smul.addr %s273, 4
      %s275 = scalar_lea.vmem %s1, %s274
      %p276 = pneg %p64
      %p277 = pneg %p61
      %p278 = scmp.lt.s32.totalorder %s17, 2
      %s279 = scalar_select %p278, %s17, 2
      %s280 = smul.addr %s279, 16
      %s281 = smul.addr %s280, 4
      %s282 = scalar_lea.vmem %s2, %s281
      %p283 = pneg %p90
      %p284 = pneg %p87
      %p285 = scmp.lt.s32.totalorder %s17, 2
      %s286 = scalar_select %p285, %s17, 2
      %s287 = scalar_lea.vmem %s3, %s286
      %p288 = pneg %p116
      %p289 = pneg %p113
      %p290 = scmp.lt.s32.totalorder %s17, 2
      %s291 = scalar_select %p290, %s17, 2
      %s292 = smul.addr %s291, 16
      %s293 = smul.addr %s292, 4
      %s294 = scalar_lea.vmem %s4, %s293
      %p295 = pneg %p142
      %p296 = pneg %p139
      %p297 = scmp.lt.s32.totalorder %s17, 2
      %s298 = scalar_select %p297, %s17, 2
      %s299 = scalar_lea.vmem %s5, %s298
      %p300 = pneg %p168
      %p301 = pneg %p165
      %p302 = pneg %p194
      %p303 = pneg %p191
      %p304 = scmp.lt.s32.totalorder %s17, 2
      %s305 = scalar_select %p304, %s17, 2
      %s306 = smul.addr %s305, 2
      %s307 = smul.addr %s306, 8
      %s308 = scalar_lea.vmem %s6, %s307
      %p309 = scmp.lt.s32.totalorder %s17, 2
      %s310 = scalar_select %p309, %s17, 2
      %s311 = smul.addr %s310, 2
      %s312 = smul.addr %s311, 4
      %s313 = scalar_lea.vmem %s0, %s312
      %p314 = scmp.lt.s32.totalorder %s17, 2
      %s315 = scalar_select %p314, %s17, 2
      %s316 = smul.addr %s315, 2
      %s317 = smul.addr %s316, 4
      %s318 = scalar_lea.vmem %s1, %s317
      %p319 = scmp.lt.s32.totalorder %s17, 2
      %s320 = scalar_select %p319, %s17, 2
      %s321 = smul.addr %s320, 16
      %s322 = smul.addr %s321, 4
      %s323 = scalar_lea.vmem %s2, %s322
      %p324 = scmp.lt.s32.totalorder %s17, 2
      %s325 = scalar_select %p324, %s17, 2
      %s326 = scalar_lea.vmem %s3, %s325
      %p327 = scmp.lt.s32.totalorder %s17, 2
      %s328 = scalar_select %p327, %s17, 2
      %s329 = smul.addr %s328, 16
      %s330 = smul.addr %s329, 4
      %s331 = scalar_lea.vmem %s4, %s330
      %p332 = scmp.lt.s32.totalorder %s17, 2
      %s333 = scalar_select %p332, %s17, 2
      %s334 = scalar_lea.vmem %s5, %s333
      %p335 = scmp.lt.s32.totalorder %s17, 2
      %s336 = scalar_select %p335, %s17, 2
      %s337 = smul.addr %s336, 2
      %s338 = smul.addr %s337, 8
      %s339 = scalar_lea.vmem %s6, %s338
      %v341 = vld [vmem:[%s313] sm:$0xf]
      %v342 = vld [vmem:[%s313 + $0x4] sm:$0xf]
      %v343 = vld [vmem:[%s318] sm:$0xf]
      %v344 = vld [vmem:[%s318 + $0x4] sm:$0xf]
      %v345 = vld [vmem:[%s323] sm:$0xf]
      %v346 = vld [vmem:[%s323 + $0x4] sm:$0xf]
      %v347 = vld [vmem:[%s323 + $0x8] sm:$0xf]
      %v348 = vld [vmem:[%s323 + $0xc] sm:$0xf]
      %v349 = vld [vmem:[%s323 + $0x10] sm:$0xf]
      %v350 = vld [vmem:[%s323 + $0x14] sm:$0xf]
      %v351 = vld [vmem:[%s323 + $0x18] sm:$0xf]
      %v352 = vld [vmem:[%s323 + $0x1c] sm:$0xf]
      %v353 = vld [vmem:[%s323 + $0x20] sm:$0xf]
      %v354 = vld [vmem:[%s323 + $0x24] sm:$0xf]
      %v355 = vld [vmem:[%s323 + $0x28] sm:$0xf]
      %v356 = vld [vmem:[%s323 + $0x2c] sm:$0xf]
      %v357 = vld [vmem:[%s323 + $0x30] sm:$0xf]
      %v358 = vld [vmem:[%s323 + $0x34] sm:$0xf]
      %v359 = vld [vmem:[%s323 + $0x38] sm:$0xf]
      %v360 = vld [vmem:[%s323 + $0x3c] sm:$0xf]
      %v361 = vld [vmem:[%s331] sm:$0xf]
      %v362 = vld [vmem:[%s331 + $0x4] sm:$0xf]
      %v363 = vld [vmem:[%s331 + $0x8] sm:$0xf]
      %v364 = vld [vmem:[%s331 + $0xc] sm:$0xf]
      %v365 = vld [vmem:[%s331 + $0x10] sm:$0xf]
      %v366 = vld [vmem:[%s331 + $0x14] sm:$0xf]
      %v367 = vld [vmem:[%s331 + $0x18] sm:$0xf]
      %v368 = vld [vmem:[%s331 + $0x1c] sm:$0xf]
      %v369 = vld [vmem:[%s331 + $0x20] sm:$0xf]
      %v370 = vld [vmem:[%s331 + $0x24] sm:$0xf]
      %v371 = vld [vmem:[%s331 + $0x28] sm:$0xf]
      %v372 = vld [vmem:[%s331 + $0x2c] sm:$0xf]
      %v373 = vld [vmem:[%s331 + $0x30] sm:$0xf]
      %v374 = vld [vmem:[%s331 + $0x34] sm:$0xf]
      %v375 = vld [vmem:[%s331 + $0x38] sm:$0xf]
      %v376 = vld [vmem:[%s331 + $0x3c] sm:$0xf]
      %v379 = vunpack.c.l.b16 %v343
      %v380 = vunpack.c.l.b16 %v344
      %v381 = vpack.c.b16 %v380, %v379
      %v399 = vunpack.c.l.b16 %v345
      %v400 = vunpack.c.l.b16 %v346
      %v401 = vunpack.c.l.b16 %v347
      %v402 = vunpack.c.l.b16 %v348
      %v403 = vunpack.c.l.b16 %v349
      %v404 = vunpack.c.l.b16 %v350
      %v405 = vunpack.c.l.b16 %v351
      %v406 = vunpack.c.l.b16 %v352
      %v407 = vunpack.c.l.b16 %v353
      %v408 = vunpack.c.l.b16 %v354
      %v409 = vunpack.c.l.b16 %v355
      %v410 = vunpack.c.l.b16 %v356
      %v411 = vunpack.c.l.b16 %v357
      %v412 = vunpack.c.l.b16 %v358
      %v413 = vunpack.c.l.b16 %v359
      %v414 = vunpack.c.l.b16 %v360
      %v415 = vpack.c.b16 %v400, %v399
      %v416 = vpack.c.b16 %v402, %v401
      %v417 = vpack.c.b16 %v404, %v403
      %v418 = vpack.c.b16 %v406, %v405
      %v419 = vpack.c.b16 %v408, %v407
      %v420 = vpack.c.b16 %v410, %v409
      %v421 = vpack.c.b16 %v412, %v411
      %v422 = vpack.c.b16 %v414, %v413
      %431 = vmatprep.subr.bf16.mxu0 0
      %432 = vmatpush1.bf16.msra.mxu0 %v415
      %433 = vmatprep.subr.bf16.mxu0 0
      %434 = vmatpush1.bf16.msra.mxu0 %v416
      %435 = vmatprep.subr.bf16.mxu0 0
      %436 = vmatpush1.bf16.msra.mxu0 %v417
      %437 = vmatprep.subr.bf16.mxu0 0
      %438 = vmatpush1.bf16.msra.mxu0 %v418
      %439 = vmatprep.subr.bf16.mxu0 0
      %440 = vmatpush1.bf16.msra.mxu0 %v419
      %441 = vmatprep.subr.bf16.mxu0 0
      %442 = vmatpush1.bf16.msra.mxu0 %v420
      %443 = vmatprep.subr.bf16.mxu0 0
      %444 = vmatpush1.bf16.msra.mxu0 %v421
      %445 = vmatprep.subr.bf16.mxu0 0
      %446 = vmatpush1.bf16.msra.mxu0 %v422
      %447 = vmatprep.subr.bf16.mxu0 0
      %448 = vmatpush1.bf16.msra.mxu0 0
      %449 = vmatprep.subr.bf16.mxu0 0
      %450 = vmatpush1.bf16.msra.mxu0 0
      %451 = vmatprep.subr.bf16.mxu0 0
      %452 = vmatpush1.bf16.msra.mxu0 0
      %453 = vmatprep.subr.bf16.mxu0 0
      %454 = vmatpush1.bf16.msra.mxu0 0
      %455 = vmatprep.subr.bf16.mxu0 0
      %456 = vmatpush1.bf16.msra.mxu0 0
      %457 = vmatprep.subr.bf16.mxu0 0
      %458 = vmatpush1.bf16.msra.mxu0 0
      %459 = vmatprep.subr.bf16.mxu0 0
      %460 = vmatpush1.bf16.msra.mxu0 0
      %461 = vmatprep.subr.bf16.mxu0 0
      %462 = vmatpush1.bf16.msra.mxu0 0
      %463 = vmatprep.mubr.bf16.mxu0 0
      %464 = vmatmul.mubr.bf16.gmra.mrb[0].mxu0 %v381
      %v465 = vpop.f32.mrb[0].mxu0
      %v466 = vadd.f32 0.0, %v465
      %v467 = vpop.f32.mrb[0].mxu0
      %v468 = vpop.f32.mrb[0].mxu0
      %v469 = vadd.f32 0.0, %v468
      %v470 = vpop.f32.mrb[0].mxu0
      %471 = vdwg.mxu0
      %v472 = vpack.c.bf16 %v469, %v466
      %v473 = vld [vmem:[%s326] sm:$0x1]
      %v475 = vlaneseq
      %v476 = vshrl.u32 %v475, 7
      %v477 = vsub.s32 0, %v476
      %v478 = vrot.slane %v473, %v477
      %v482 = vunpack.c.l.b16 %v341
      %v483 = vunpack.c.l.b16 %v342
      %v484 = vpack.c.b16 %v483, %v482
      %vm485 = vcmask 130048
      %v487 = vsel %vm485, %v484, 0
      %489 = vmatprep.subr.bf16.mxu0 0
      %490 = vmatpush1.bf16.msra.mxu0 %v472
      %491 = vmatprep.subr.bf16.mxu0 0
      %492 = vmatpush1.bf16.msra.mxu0 0
      %493 = vmatprep.subr.bf16.mxu0 0
      %494 = vmatpush1.bf16.msra.mxu0 0
      %495 = vmatprep.subr.bf16.mxu0 0
      %496 = vmatpush1.bf16.msra.mxu0 0
      %497 = vmatprep.subr.bf16.mxu0 0
      %498 = vmatpush1.bf16.msra.mxu0 0
      %499 = vmatprep.subr.bf16.mxu0 0
      %500 = vmatpush1.bf16.msra.mxu0 0
      %501 = vmatprep.subr.bf16.mxu0 0
      %502 = vmatpush1.bf16.msra.mxu0 0
      %503 = vmatprep.subr.bf16.mxu0 0
      %504 = vmatpush1.bf16.msra.mxu0 0
      %505 = vmatprep.subr.bf16.mxu0 0
      %506 = vmatpush1.bf16.msra.mxu0 0
      %507 = vmatprep.subr.bf16.mxu0 0
      %508 = vmatpush1.bf16.msra.mxu0 0
      %509 = vmatprep.subr.bf16.mxu0 0
      %510 = vmatpush1.bf16.msra.mxu0 0
      %511 = vmatprep.subr.bf16.mxu0 0
      %512 = vmatpush1.bf16.msra.mxu0 0
      %513 = vmatprep.subr.bf16.mxu0 0
      %514 = vmatpush1.bf16.msra.mxu0 0
      %515 = vmatprep.subr.bf16.mxu0 0
      %516 = vmatpush1.bf16.msra.mxu0 0
      %517 = vmatprep.subr.bf16.mxu0 0
      %518 = vmatpush1.bf16.msra.mxu0 0
      %519 = vmatprep.subr.bf16.mxu0 0
      %520 = vmatpush1.bf16.msra.mxu0 0
      %521 = vmatprep.mubr.bf16.mxu0 0
      %522 = vmatmul.mubr.bf16.gmra.mrb[0].mxu0 %v487
      %v523 = vpop.f32.mrb[0].mxu0
      %v524 = vadd.f32 %v478, %v523
      %v525 = vpop.f32.mrb[0].mxu0
      %v526 = vpop.f32.mrb[0].mxu0
      %v527 = vadd.f32 %v478, %v526
      %v528 = vpop.f32.mrb[0].mxu0
      %529 = vdwg.mxu0
      %v530 = vmax.f32 %v524, 0.0
      %v531 = vmax.f32 %v527, 0.0
      %v532 = vpack.c.bf16 %v531, %v530
      %v549 = vunpack.c.l.b16 %v361
      %v550 = vunpack.c.l.b16 %v362
      %v551 = vunpack.c.l.b16 %v363
      %v552 = vunpack.c.l.b16 %v364
      %v553 = vunpack.c.l.b16 %v365
      %v554 = vunpack.c.l.b16 %v366
      %v555 = vunpack.c.l.b16 %v367
      %v556 = vunpack.c.l.b16 %v368
      %v557 = vunpack.c.l.b16 %v369
      %v558 = vunpack.c.l.b16 %v370
      %v559 = vunpack.c.l.b16 %v371
      %v560 = vunpack.c.l.b16 %v372
      %v561 = vunpack.c.l.b16 %v373
      %v562 = vunpack.c.l.b16 %v374
      %v563 = vunpack.c.l.b16 %v375
      %v564 = vunpack.c.l.b16 %v376
      %v565 = vpack.c.b16 %v550, %v549
      %v566 = vpack.c.b16 %v552, %v551
      %v567 = vpack.c.b16 %v554, %v553
      %v568 = vpack.c.b16 %v556, %v555
      %v569 = vpack.c.b16 %v558, %v557
      %v570 = vpack.c.b16 %v560, %v559
      %v571 = vpack.c.b16 %v562, %v561
      %v572 = vpack.c.b16 %v564, %v563
      %581 = vmatprep.subr.bf16.mxu0 0
      %582 = vmatpush1.bf16.msra.mxu0 %v565
      %583 = vmatprep.subr.bf16.mxu0 0
      %584 = vmatpush1.bf16.msra.mxu0 %v566
      %585 = vmatprep.subr.bf16.mxu0 0
      %586 = vmatpush1.bf16.msra.mxu0 %v567
      %587 = vmatprep.subr.bf16.mxu0 0
      %588 = vmatpush1.bf16.msra.mxu0 %v568
      %589 = vmatprep.subr.bf16.mxu0 0
      %590 = vmatpush1.bf16.msra.mxu0 %v569
      %591 = vmatprep.subr.bf16.mxu0 0
      %592 = vmatpush1.bf16.msra.mxu0 %v570
      %593 = vmatprep.subr.bf16.mxu0 0
      %594 = vmatpush1.bf16.msra.mxu0 %v571
      %595 = vmatprep.subr.bf16.mxu0 0
      %596 = vmatpush1.bf16.msra.mxu0 %v572
      %597 = vmatprep.subr.bf16.mxu0 0
      %598 = vmatpush1.bf16.msra.mxu0 0
      %599 = vmatprep.subr.bf16.mxu0 0
      %600 = vmatpush1.bf16.msra.mxu0 0
      %601 = vmatprep.subr.bf16.mxu0 0
      %602 = vmatpush1.bf16.msra.mxu0 0
      %603 = vmatprep.subr.bf16.mxu0 0
      %604 = vmatpush1.bf16.msra.mxu0 0
      %605 = vmatprep.subr.bf16.mxu0 0
      %606 = vmatpush1.bf16.msra.mxu0 0
      %607 = vmatprep.subr.bf16.mxu0 0
      %608 = vmatpush1.bf16.msra.mxu0 0
      %609 = vmatprep.subr.bf16.mxu0 0
      %610 = vmatpush1.bf16.msra.mxu0 0
      %611 = vmatprep.subr.bf16.mxu0 0
      %612 = vmatpush1.bf16.msra.mxu0 0
      %613 = vmatprep.mubr.bf16.mxu0 0
      %614 = vmatmul.mubr.bf16.gmra.mrb[0].mxu0 %v532
      %v615 = vpop.f32.mrb[0].mxu0
      %v616 = vadd.f32 0.0, %v615
      %v617 = vpop.f32.mrb[0].mxu0
      %v618 = vpop.f32.mrb[0].mxu0
      %v619 = vadd.f32 0.0, %v618
      %v620 = vpop.f32.mrb[0].mxu0
      %621 = vdwg.mxu0
      %v622 = vpack.c.bf16 %v619, %v616
      %v623 = vld [vmem:[%s334] sm:$0x1]
      %v625 = vlaneseq
      %v626 = vshrl.u32 %v625, 7
      %v627 = vsub.s32 0, %v626
      %v628 = vrot.slane %v623, %v627
      %630 = vmatprep.subr.bf16.mxu0 0
      %631 = vmatpush1.bf16.msra.mxu0 %v622
      %632 = vmatprep.subr.bf16.mxu0 0
      %633 = vmatpush1.bf16.msra.mxu0 0
      %634 = vmatprep.subr.bf16.mxu0 0
      %635 = vmatpush1.bf16.msra.mxu0 0
      %636 = vmatprep.subr.bf16.mxu0 0
      %637 = vmatpush1.bf16.msra.mxu0 0
      %638 = vmatprep.subr.bf16.mxu0 0
      %639 = vmatpush1.bf16.msra.mxu0 0
      %640 = vmatprep.subr.bf16.mxu0 0
      %641 = vmatpush1.bf16.msra.mxu0 0
      %642 = vmatprep.subr.bf16.mxu0 0
      %643 = vmatpush1.bf16.msra.mxu0 0
      %644 = vmatprep.subr.bf16.mxu0 0
      %645 = vmatpush1.bf16.msra.mxu0 0
      %646 = vmatprep.subr.bf16.mxu0 0
      %647 = vmatpush1.bf16.msra.mxu0 0
      %648 = vmatprep.subr.bf16.mxu0 0
      %649 = vmatpush1.bf16.msra.mxu0 0
      %650 = vmatprep.subr.bf16.mxu0 0
      %651 = vmatpush1.bf16.msra.mxu0 0
      %652 = vmatprep.subr.bf16.mxu0 0
      %653 = vmatpush1.bf16.msra.mxu0 0
      %654 = vmatprep.subr.bf16.mxu0 0
      %655 = vmatpush1.bf16.msra.mxu0 0
      %656 = vmatprep.subr.bf16.mxu0 0
      %657 = vmatpush1.bf16.msra.mxu0 0
      %658 = vmatprep.subr.bf16.mxu0 0
      %659 = vmatpush1.bf16.msra.mxu0 0
      %660 = vmatprep.subr.bf16.mxu0 0
      %661 = vmatpush1.bf16.msra.mxu0 0
      %662 = vmatprep.mubr.bf16.mxu0 0
      %663 = vmatmul.mubr.bf16.gmra.mrb[0].mxu0 %v487
      %v664 = vpop.f32.mrb[0].mxu0
      %v665 = vadd.f32 %v628, %v664
      %v666 = vpop.f32.mrb[0].mxu0
      %v667 = vpop.f32.mrb[0].mxu0
      %v668 = vadd.f32 %v628, %v667
      %v669 = vpop.f32.mrb[0].mxu0
      %670 = vdwg.mxu0
      %671 = vst [vmem:[%s339] sm:$0xff] %v665
      %672 = vst [vmem:[%s339 + $0x8] sm:$0xff] %v668
      %p673 = scmp.lt.s32.totalorder %s17, 2
      %s674 = scalar_select %p673, %s17, 2
      %s675 = smul.addr %s674, 2
      %s676 = smul.addr %s675, 8
      %s677 = scalar_lea.vmem %s6, %s676
      // Predicated region
      $region45: #{single_gnn_forward.1} parent=43 // pred_check
        %p678 = pneg %p191
      $region46: #{single_gnn_forward.1} parent=43 // pred_check_branch
        %680 = sbr.rel (%p678) target = $region48
      $region47: #{single_gnn_forward.1} parent=43 // pred_region
        _
      $region48: #{single_gnn_forward.1} parent=43 // pred_fallthru
        _
    $region44: #{single_gnn_forward.1} parent=5 // pred_fallthru
      _
    %p681 = scmp.le.s32.totalorder 2, %s12
    // Predicated region
    $region49: #{single_gnn_forward.1} parent=5 // pred_check
      %p682 = pneg %p681
    $region50: #{single_gnn_forward.1} parent=5 // pred_check_branch
      %684 = sbr.rel (%p682) target = $region52
    $region51: #{single_gnn_forward.1} parent=5 // pred_region
      %s685 = ssub.s32 %s12, 2
      // Predicated region
      $region53: #{single_gnn_forward.1} parent=51 // pred_check
        %p686 = pneg %p197
      $region54: #{single_gnn_forward.1} parent=51 // pred_check_branch
        %688 = sbr.rel (%p686) target = $region56
      $region55: #{single_gnn_forward.1} parent=51 // pred_region
        %p689 = scmp.lt.s32.totalorder %s18, 2
        %s690 = scalar_select %p689, %s18, 2
        %s691 = smul.addr %s690, 2
        %s692 = smul.addr %s691, 8
        %s693 = scalar_lea.vmem %s6, %s692
      $region56: #{single_gnn_forward.1} parent=51 // pred_fallthru
        _
    $region52: #{single_gnn_forward.1} parent=5 // pred_fallthru
      _
  $region6: #{single_gnn_forward.1} parent=0 // loop_footer
    %s16 = sadd.s32 1, %s12
  $region7: #{single_gnn_forward.1} parent=0 // loop_footer_branch
    %11 = sbr.rel target = $region3
  $region8: #{single_gnn_forward.1} parent=0 // loop_exit
    _

</llo_original>
